<compile_context>
chip_gen: v6e
topology: v6e:2x2x1
jax: 0.10.0
libtpu: 0.0.40
codegen_flags: <defaults>
</compile_context>

<pallas_src>
import jax
import jax.numpy as jnp
from jax.experimental import pallas as pl
from jax.experimental.pallas import tpu as pltpu

_SUB = 8                          # sublane granularity
_LANE_MIN = 128                   # lane granularity
_TARGET_BLOCK_BYTES = 4 << 20     # ~4 MiB per block, sized on the I/O dtype
_VMEM_LIMIT_BYTES = 64 << 20      # explicit scoped-VMEM budget (covers v5e default)

_INV_SQRT2 = 0.7071067811865476


def _gelu_kernel(x_ref, o_ref):
    xf = x_ref[...].astype(jnp.float32)
    # exact GELU: 0.5 * x * (1 + erf(x / sqrt(2)))  (torch.nn.GELU() default)
    y = 0.5 * xf * (1.0 + jax.lax.erf(xf * jnp.float32(_INV_SQRT2)))
    o_ref[...] = y.astype(o_ref.dtype)


def _gelu_exact_jnp(x: jax.Array) -> jax.Array:
    xf = x.astype(jnp.float32)
    return (0.5 * xf * (1.0 + jax.lax.erf(xf * jnp.float32(_INV_SQRT2)))).astype(x.dtype)


def _gelu_pallas_2d(x2d: jax.Array) -> jax.Array:
    """Run the GELU kernel on a (rows, lane) array with lane % 128 == 0."""
    rows, lane = x2d.shape
    itemsize = jnp.dtype(x2d.dtype).itemsize

    # Block sizing on the actual I/O itemsize; multiple of 8 sublanes.
    rows_per_block = (_TARGET_BLOCK_BYTES // (lane * itemsize)) // _SUB * _SUB
    rows_per_block = max(_SUB, rows_per_block)

    if rows <= _SUB:
        block_rows = rows                      # full-extent block (exempt from (8,128))
    else:
        # Guarantee >= 2 grid steps so v7x's second TensorCore gets work.
        half = -(-rows // 2)                   # cdiv(rows, 2)
        half = -(-half // _SUB) * _SUB         # round up to multiple of 8
        block_rows = min(rows_per_block, half)

    grid = (pl.cdiv(rows, block_rows),)        # last block may be partial (clipped)

    return pl.pallas_call(
        _gelu_kernel,
        out_shape=jax.ShapeDtypeStruct((rows, lane), x2d.dtype),
        grid_spec=pltpu.PrefetchScalarGridSpec(
            num_scalar_prefetch=0,
            grid=grid,
            in_specs=[pl.BlockSpec((block_rows, lane), lambda i: (i, 0))],
            out_specs=pl.BlockSpec((block_rows, lane), lambda i: (i, 0)),
        ),
        compiler_params=pltpu.CompilerParams(
            dimension_semantics=("parallel",),
            vmem_limit_bytes=_VMEM_LIMIT_BYTES,
        ),
    )(x2d)


def gelu_pallas(x: jax.Array) -> jax.Array:
    orig_shape = x.shape
    n = x.size
    if n == 0:
        return x
    if n < _LANE_MIN:
        # Tiny tensor: a kernel launch + layout plumbing costs more than the math.
        return _gelu_exact_jnp(x)

    flat = x.reshape(-1)
    n_tail = n % _LANE_MIN
    n_prefix = n - n_tail

    # Widest lane-dense last dim (multiple of 128) that divides the aligned prefix,
    # so the common (128-aligned) path needs zero pad/slice copies.
    lane = _LANE_MIN
    for cand in (2048, 1024, 512, 256, 128):
        if n_prefix % cand == 0:
            lane = cand
            break
    rows = n_prefix // lane

    if n_tail == 0:
        out = _gelu_pallas_2d(flat.reshape(rows, lane))
        return out.reshape(orig_shape)

    # Unaligned: Pallas on the 128-aligned prefix, plain jnp on the <128-elem tail.
    out_prefix = _gelu_pallas_2d(flat[:n_prefix].reshape(rows, lane)).reshape(-1)
    out_tail = _gelu_exact_jnp(flat[n_prefix:])
    return jnp.concatenate([out_prefix, out_tail]).reshape(orig_shape)


def gelu_ref(x: jax.Array) -> jax.Array:
    return _gelu_exact_jnp(x)


if __name__ == "__main__":
    key = jax.random.PRNGKey(0)

    # NCHW-style input consistent with typical usage of this activation module.
    x = jax.random.normal(key, (2, 4, 16, 16), dtype=jnp.float32)
    y = gelu_pallas(x)
    jax.block_until_ready(y)
    assert y.shape == x.shape and y.dtype == x.dtype
    assert jnp.allclose(y, gelu_ref(x), atol=1e-5, rtol=1e-5)

    # Non-128-multiple size with an aligned prefix (exercises partial last block
    # + multi-step grid + tail path).
    x2 = jax.random.normal(jax.random.PRNGKey(1), (3, 5, 130), dtype=jnp.float32)
    y2 = gelu_pallas(x2)
    jax.block_until_ready(y2)
    assert jnp.allclose(y2, gelu_ref(x2), atol=1e-5, rtol=1e-5)

    # Tiny (<128 elements) tensor path.
    x3 = jax.random.normal(jax.random.PRNGKey(2), (3, 5, 7), dtype=jnp.float32)
    y3 = gelu_pallas(x3)
    jax.block_until_ready(y3)
    assert jnp.allclose(y3, gelu_ref(x3), atol=1e-5, rtol=1e-5)

    # bf16 I/O (exercises dtype-aware block sizing; math stays f32 in-kernel).
    x4 = jax.random.normal(jax.random.PRNGKey(3), (4, 8, 32), dtype=jnp.bfloat16)
    y4 = gelu_pallas(x4)
    jax.block_until_ready(y4)
    assert y4.dtype == jnp.bfloat16
    assert jnp.allclose(y4.astype(jnp.float32), gelu_ref(x4).astype(jnp.float32),
                        atol=2e-2, rtol=2e-2)

    print("KERNEL_OK")
</pallas_src>

<mosaic_0001>
module attributes {stable_mosaic.version = 11 : i64} {
  func.func @_gelu_kernel(%arg0: i32, %arg1: memref<1x2048xf32, #tpu.memory_space<vmem>>, %arg2: memref<1x2048xf32, #tpu.memory_space<vmem>>) attributes {dimension_semantics = [#tpu.dimension_semantics<parallel>], iteration_bounds = array<i64: 1>, scalar_prefetch = 0 : i64, scratch_operands = 0 : i64, tpu.core_type = #tpu.core_type<tc>, window_params = [{transform_indices = @transform_0, window_bounds = array<i64: 1, 2048>}, {transform_indices = @transform_1, window_bounds = array<i64: 1, 2048>}]} {
    %c0 = arith.constant 0 : index
    %c0_0 = arith.constant 0 : index
    %0 = vector.load %arg1[%c0, %c0_0] : memref<1x2048xf32, #tpu.memory_space<vmem>>, vector<1x2048xf32>
    %cst = arith.constant 5.000000e-01 : f32
    %1 = vector.broadcast %cst : f32 to vector<1x2048xf32>
    %2 = arith.mulf %1, %0 : vector<1x2048xf32>
    %cst_1 = arith.constant 0.707106769 : f32
    %3 = vector.broadcast %cst_1 : f32 to vector<1x2048xf32>
    %4 = arith.mulf %0, %3 : vector<1x2048xf32>
    %5 = math.erf %4 : vector<1x2048xf32>
    %cst_2 = arith.constant 1.000000e+00 : f32
    %6 = vector.broadcast %cst_2 : f32 to vector<1x2048xf32>
    %7 = arith.addf %6, %5 : vector<1x2048xf32>
    %8 = arith.mulf %2, %7 : vector<1x2048xf32>
    %c0_3 = arith.constant 0 : index
    %c0_4 = arith.constant 0 : index
    %9 = vector.load %arg2[%c0_3, %c0_4] : memref<1x2048xf32, #tpu.memory_space<vmem>>, vector<1x2048xf32>
    tpu.vector_store %arg2[%c0_3, %c0_4], %8 {strides = array<i32>} : memref<1x2048xf32, #tpu.memory_space<vmem>>, vector<1x2048xf32>,
    return
  }
  func.func @transform_0(%arg0: i32) -> (i32, i32) {
    %c0_i32 = arith.constant 0 : i32
    %c0_i32_0 = arith.constant 0 : i32
    return %arg0, %c0_i32 : i32, i32
  }
  func.func @transform_1(%arg0: i32) -> (i32, i32) {
    %c0_i32 = arith.constant 0 : i32
    %c0_i32_0 = arith.constant 0 : i32
    return %arg0, %c0_i32 : i32, i32
  }
}

</mosaic_0001>

<llo_original>
// kernel: tpu_custom_call.1
$region0: #{tpu_custom_call.1}
  #allocation0 [shape = 'u32[]', space=smem, size = 0x4, offset = 0x4, fixed_abs, tag = 'smem constant byte address 0x4 - core index']
  #allocation1 [shape = 'u32[144,128]{1,0:T(1,128)}', space=vmem, size = 0x12000, scoped, tag = 'internal scratch']
  %s0 = inlined_call_operand.hbm [shape: f32[1,2048], index: 0, kind: input, shape index: {}]
  %s1 = inlined_call_operand.hbm [shape: f32[1,2048], index: 1, kind: output, shape index: {}]
  %s2 = sld [smem:[#allocation0]]
  $region18: #{tpu_custom_call.1} parent=0
    _
  %s4 = ssub.s32 1, %s2
  %s5 = scalar_select 0, %s4, %s2
  $region1: #{tpu_custom_call.1} parent=0
    #allocation2 [shape = 'u8[8192]{0}', space=vmem, size = 0x2000, scoped, tag = 'input window, operand 0, single buffered']
    #allocation3 [shape = 's32[1]{0}', space=sflag, size = 0x4, scoped, tag = 'scoped memory for tpu_custom_call.1']
    #allocation4 [shape = 's32[1]{0}', space=sflag, size = 0x4, scoped, tag = 'scoped memory for tpu_custom_call.1']
    #allocation5 [shape = 'u8[8192]{0}', space=vmem, size = 0x2000, scoped, tag = 'output window, operand 0, single buffered']
    %6 = vsyncpa [#allocation3], 0
    %7 = vsyncpa [#allocation4], 0
    // Predicated region
    $region2: #{tpu_custom_call.1} parent=1 // pred_check
      _
    $region3: #{tpu_custom_call.1} parent=1 // pred_check_branch
      %9 = sbr.rel (0) target = $region5
    $region4: #{tpu_custom_call.1} parent=1 // pred_region
      %s11 = ssub.s32 256, 256
      %12 = vsyncadd [#allocation3], %s11
      %s14 = sshll.u32 [#allocation2], 4
      %s15 = int_to_ptr.vmem [resolvable:$true] %s14
      %17 = dma.hbm_to_vmem [thread:$0]  %s0, 256, %s15, [#allocation3]
    $region5: #{tpu_custom_call.1} parent=1 // pred_fallthru
      _
    // Predicated region
    $region6: #{tpu_custom_call.1} parent=1 // pred_check
      _
    $region7: #{tpu_custom_call.1} parent=1 // pred_check_branch
      %19 = sbr.rel (0) target = $region9
    $region8: #{tpu_custom_call.1} parent=1 // pred_region
      %20 = dma.done [#allocation3], 256
    $region9: #{tpu_custom_call.1} parent=1 // pred_fallthru
      _
    %v21 = vld [vmem:[#allocation2] sm:$0xff]
    %v22 = vld [vmem:[#allocation2 + $0x8] sm:$0xff]
    %v23 = vmul.f32 %v21, 0.5
    %v24 = vmul.f32 %v22, 0.5
    %v25 = vmul.f32 %v21, 0.70710677
    %v26 = vmul.f32 %v22, 0.70710677
    %v27 = verf.f32.pop %v25
    %v28 = verf.f32.pop %v26
    %v29 = vadd.f32 %v27, 1.0
    %v30 = vadd.f32 %v28, 1.0
    %v31 = vmul.f32 %v23, %v29
    %v32 = vmul.f32 %v24, %v30
    %33 = vst [vmem:[#allocation5] sm:$0xff] %v31
    %34 = vst [vmem:[#allocation5 + $0x8] sm:$0xff] %v32
    // Predicated region
    $region10: #{tpu_custom_call.1} parent=1 // pred_check
      _
    $region11: #{tpu_custom_call.1} parent=1 // pred_check_branch
      %36 = sbr.rel (0) target = $region13
    $region12: #{tpu_custom_call.1} parent=1 // pred_region
      %s38 = ssub.s32 256, 256
      %39 = vsyncadd [#allocation4], %s38
      %s41 = sshll.u32 [#allocation5], 4
      %s42 = int_to_ptr.vmem [resolvable:$true] %s41
      %44 = dma.vmem_to_hbm [thread:$0]  %s42, 256, %s1, [#allocation4]
    $region13: #{tpu_custom_call.1} parent=1 // pred_fallthru
      _
    // Predicated region
    $region14: #{tpu_custom_call.1} parent=1 // pred_check
      _
    $region15: #{tpu_custom_call.1} parent=1 // pred_check_branch
      %46 = sbr.rel (0) target = $region17
    $region16: #{tpu_custom_call.1} parent=1 // pred_region
      %47 = dma.done [#allocation4], 256
    $region17: #{tpu_custom_call.1} parent=1 // pred_fallthru
      _
    %48 = vsyncpa [#allocation3], 1
    %49 = vsyncpa [#allocation4], 1

</llo_original>
